<compile_context>
chip_gen: v5e
topology: v5e:2x2
jax: 0.10.0
libtpu: 0.0.40
codegen_flags: <defaults>
</compile_context>

<pallas_src>
import jax
import jax.numpy as jnp
from jax.experimental import pallas as pl
from jax.experimental.pallas import tpu as pltpu


# ---------------------------------------------------------------------------
# Kernel: whole forward fused in one kernel (4 MXU matmuls + f32 VPU epilogue)
# ---------------------------------------------------------------------------
def autoencoder_kernel(x_ref,
                       w1_ref, b1_ref, w2_ref, b2_ref,
                       w3_ref, b3_ref, w4_ref, b4_ref,
                       recon_ref, code_ref):
    cdt = w1_ref.dtype                    # matmul operand dtype (bf16 or f32)
    x = x_ref[...].astype(cdt)            # cast on the VPU (no wrapper HBM pass)

    # encoder
    h1 = jnp.dot(x, w1_ref[...], preferred_element_type=jnp.float32) + b1_ref[...]
    h1 = jnp.maximum(h1, 0.0).astype(cdt)
    code_f32 = (jnp.dot(h1, w2_ref[...], preferred_element_type=jnp.float32)
                + b2_ref[...])

    # decoder
    h2 = (jnp.dot(code_f32.astype(cdt), w3_ref[...],
                  preferred_element_type=jnp.float32) + b3_ref[...])
    h2 = jnp.maximum(h2, 0.0).astype(cdt)
    recon = (jnp.dot(h2, w4_ref[...], preferred_element_type=jnp.float32)
             + b4_ref[...])

    code_ref[...] = code_f32.astype(code_ref.dtype)
    recon_ref[...] = recon.astype(recon_ref.dtype)


# ---------------------------------------------------------------------------
# Helpers
# ---------------------------------------------------------------------------
def _round_up(n, m):
    return (n + m - 1) // m * m


def _pad_to(a, shape):
    pads = [(0, t - s) for s, t in zip(a.shape, shape)]
    if all(p == (0, 0) for p in pads):
        return a
    return jnp.pad(a, pads)


def _vmem_capacity_bytes():
    try:
        return int(pltpu.get_tpu_info().vmem_capacity_bytes)
    except Exception:
        return 64 << 20          # conservative fallback (v7x per-core VMEM)


def _vmem_bytes(block_b, din, l, hp, x_item, c_item, o_item):
    """Per-call VMEM footprint: double-buffered tiles + weights + live temps."""
    io = 2 * block_b * din * x_item                       # x tiles
    io += 2 * block_b * (din + l) * o_item                # recon + code tiles
    w = 2 * ((din * hp + hp * l + l * hp + hp * din) * c_item
             + (2 * hp + l + din) * 4)                    # weights + f32 biases
    # live temps: in-kernel x cast, f32 h1/h2 (+ bf16 copies), f32 code, f32 recon
    tmp = block_b * (din * (c_item + 4)
                     + 2 * hp * (4 + c_item)
                     + l * (4 + c_item))
    return io + w + tmp


def _choose_block_b(batch, fits_vmem):
    """Largest power-of-two batch tile that fits the VMEM budget, then shrink
    until the grid has >=4 steps (keeps per-core double-buffering and balances
    v7x's two TensorCores) without going below the 8-row sublane minimum."""
    b8 = _round_up(max(batch, 1), 8)
    block = 8
    for cand in (1024, 512, 256, 128, 64, 32, 16, 8):
        if cand <= b8 and fits_vmem(cand):
            block = cand
            break
    while block > 8 and pl.cdiv(b8, block) < 4:
        block //= 2
    return block


# ---------------------------------------------------------------------------
# Param preparation (do ONCE, reuse across forward calls)
# ---------------------------------------------------------------------------
def prepare_params(params, *, compute_dtype=jnp.bfloat16):
    """Zero-pad hidden 64 -> 128 and cast weights to the compute dtype.
    Biases stay f32 (the bias/ReLU epilogue runs on the f32 accumulator)."""
    w1, b1 = params["w1"], params["b1"]   # [Din, H], [1, H]
    w2, b2 = params["w2"], params["b2"]   # [H, L],   [1, L]
    w3, b3 = params["w3"], params["b3"]   # [L, H],   [1, H]
    w4, b4 = params["w4"], params["b4"]   # [H, Din], [1, Din]
    din, h = w1.shape
    l = w2.shape[1]
    hp = _round_up(h, 128)                # full-width MXU / lane-dense h1,h2

    return {
        "w1": _pad_to(w1, (din, hp)).astype(compute_dtype),
        "b1": _pad_to(b1, (1, hp)).astype(jnp.float32),
        "w2": _pad_to(w2, (hp, l)).astype(compute_dtype),
        "b2": b2.astype(jnp.float32),
        "w3": _pad_to(w3, (l, hp)).astype(compute_dtype),
        "b3": _pad_to(b3, (1, hp)).astype(jnp.float32),
        "w4": _pad_to(w4, (hp, din)).astype(compute_dtype),
        "b4": b4.astype(jnp.float32),
    }


# ---------------------------------------------------------------------------
# Forward wrapper
# ---------------------------------------------------------------------------
def autoencoder_forward(x, prepared, *, block_b=None, output_dtype=None):
    """x: [B, input_dim] (native dtype). `prepared` = prepare_params(...).
    Returns (recon, code). output_dtype=None -> x.dtype; pass jnp.bfloat16 to
    halve the recon writeback traffic (opt-in, lower output precision)."""
    B, Din = x.shape
    w1, b1 = prepared["w1"], prepared["b1"]
    w2, b2 = prepared["w2"], prepared["b2"]
    w3, b3 = prepared["w3"], prepared["b3"]
    w4, b4 = prepared["w4"], prepared["b4"]
    if w1.shape[0] != Din:
        raise ValueError(f"input_dim mismatch: x has {Din}, params expect {w1.shape[0]}")
    Hp = w1.shape[1]
    L = w2.shape[1]
    out_dtype = x.dtype if output_dtype is None else output_dtype

    x_item = jnp.dtype(x.dtype).itemsize
    c_item = jnp.dtype(w1.dtype).itemsize
    o_item = jnp.dtype(out_dtype).itemsize

    # Generation-aware VMEM budget / limit.
    cap = _vmem_capacity_bytes()
    if cap >= (96 << 20):                 # 128 MiB parts: v5e / v6e
        budget, vmem_limit = 48 << 20, 96 << 20
    else:                                 # 64 MiB parts: v7x
        budget, vmem_limit = 24 << 20, 48 << 20

    if block_b is None:
        fits = lambda bb: _vmem_bytes(bb, Din, L, Hp, x_item, c_item, o_item) <= budget
        block_b = _choose_block_b(B, fits)

    B_p = _round_up(B, block_b)
    if block_b % 8 != 0 and block_b != B_p:
        raise ValueError(f"block_b={block_b} must be a multiple of 8 (sublane)")
    grid = (B_p // block_b,)

    # Derive the limit from the actual estimate (avoids under-provisioning at
    # very large Din), capped by physical capacity.
    est = _vmem_bytes(block_b, Din, L, Hp, x_item, c_item, o_item)
    vmem_limit = max(vmem_limit, min(cap, int(1.25 * est) + (4 << 20)))

    # Only the batch dim is ever padded; no dtype conversion / Din pad of x.
    x_in = x if B_p == B else jnp.pad(x, ((0, B_p - B), (0, 0)))

    def const_spec(shape):
        return pl.BlockSpec(shape, lambda i: (0,) * len(shape))

    recon_p, code_p = pl.pallas_call(
        autoencoder_kernel,
        out_shape=(
            jax.ShapeDtypeStruct((B_p, Din), out_dtype),   # recon
            jax.ShapeDtypeStruct((B_p, L), out_dtype),     # code
        ),
        grid_spec=pltpu.PrefetchScalarGridSpec(
            num_scalar_prefetch=0,
            grid=grid,
            in_specs=[
                pl.BlockSpec((block_b, Din), lambda i: (i, 0)),   # x tile
                const_spec(w1.shape), const_spec(b1.shape),
                const_spec(w2.shape), const_spec(b2.shape),
                const_spec(w3.shape), const_spec(b3.shape),
                const_spec(w4.shape), const_spec(b4.shape),
            ],
            out_specs=[
                pl.BlockSpec((block_b, Din), lambda i: (i, 0)),
                pl.BlockSpec((block_b, L), lambda i: (i, 0)),
            ],
        ),
        compiler_params=pltpu.CompilerParams(
            dimension_semantics=("parallel",),
            vmem_limit_bytes=int(vmem_limit),
        ),
    )(x_in, w1, b1, w2, b2, w3, b3, w4, b4)

    if B_p != B:
        recon_p = recon_p[:B]
        code_p = code_p[:B]
    return recon_p, code_p


# ---------------------------------------------------------------------------
# Params / reference
# ---------------------------------------------------------------------------
def init_params(key, input_dim, latent_dim=16, hidden=64):
    """Deterministic init mirroring the PyTorch module's layer shapes."""
    ks = jax.random.split(key, 8)

    def uinit(k, fan_in, shape):
        bound = 1.0 / jnp.sqrt(fan_in)
        return jax.random.uniform(k, shape, jnp.float32, -bound, bound)

    return {
        # encoder: Linear(input_dim, 64), Linear(64, latent_dim)
        "w1": uinit(ks[0], input_dim, (input_dim, hidden)),
        "b1": uinit(ks[1], input_dim, (1, hidden)),
        "w2": uinit(ks[2], hidden, (hidden, latent_dim)),
        "b2": uinit(ks[3], hidden, (1, latent_dim)),
        # decoder: Linear(latent_dim, 64), Linear(64, input_dim)
        "w3": uinit(ks[4], latent_dim, (latent_dim, hidden)),
        "b3": uinit(ks[5], latent_dim, (1, hidden)),
        "w4": uinit(ks[6], hidden, (hidden, input_dim)),
        "b4": uinit(ks[7], hidden, (1, input_dim)),
    }


def reference_forward(x, p):
    h1 = jnp.maximum(x @ p["w1"] + p["b1"], 0.0)
    code = h1 @ p["w2"] + p["b2"]
    h2 = jnp.maximum(code @ p["w3"] + p["b3"], 0.0)
    recon = h2 @ p["w4"] + p["b4"]
    return recon, code


# ---------------------------------------------------------------------------
# Test
# ---------------------------------------------------------------------------
if __name__ == "__main__":
    key = jax.random.PRNGKey(0)
    k_x, k_p = jax.random.split(key)

    batch, input_dim, latent_dim = 16, 32, 16
    x = jax.random.normal(k_x, (batch, input_dim), dtype=jnp.float32)
    params = init_params(k_p, input_dim, latent_dim)
    recon_ref, code_ref = reference_forward(x, params)

    # --- f32 compute path: tight check -----------------------------------
    prep_f32 = prepare_params(params, compute_dtype=jnp.float32)
    recon32, code32 = autoencoder_forward(x, prep_f32)
    recon32, code32 = jax.block_until_ready(recon32), jax.block_until_ready(code32)
    assert recon32.shape == (batch, input_dim) and code32.shape == (batch, latent_dim)
    assert jnp.allclose(recon32, recon_ref, atol=2e-5, rtol=2e-5)
    assert jnp.allclose(code32, code_ref, atol=2e-5, rtol=2e-5)

    # --- odd batch (exercises batch pad + grid tiling + slice-back) -------
    x_odd = x[:13]
    recon_o, code_o = autoencoder_forward(x_odd, prep_f32)
    recon_o = jax.block_until_ready(recon_o)
    assert recon_o.shape == (13, input_dim) and code_o.shape == (13, latent_dim)
    assert jnp.allclose(recon_o, recon_ref[:13], atol=2e-5, rtol=2e-5)
    assert jnp.allclose(code_o, code_ref[:13], atol=2e-5, rtol=2e-5)

    # --- default bf16 compute path (f32 outputs) --------------------------
    prep_bf16 = prepare_params(params)          # compute_dtype=bf16
    recon_bf, code_bf = autoencoder_forward(x, prep_bf16)
    recon_bf, code_bf = jax.block_until_ready(recon_bf), jax.block_until_ready(code_bf)
    assert recon_bf.dtype == x.dtype
    assert jnp.allclose(recon_bf, recon_ref, atol=5e-2, rtol=5e-2)
    assert jnp.allclose(code_bf, code_ref, atol=5e-2, rtol=5e-2)

    # --- opt-in bf16 outputs (halves recon writeback traffic) -------------
    recon_b16, code_b16 = autoencoder_forward(x, prep_bf16, output_dtype=jnp.bfloat16)
    recon_b16 = jax.block_until_ready(recon_b16)
    assert recon_b16.dtype == jnp.bfloat16 and code_b16.dtype == jnp.bfloat16
    assert jnp.allclose(recon_b16.astype(jnp.float32), recon_ref, atol=8e-2, rtol=8e-2)

    print("KERNEL_OK")
</pallas_src>

<mosaic_0001>
module attributes {stable_mosaic.version = 11 : i64} {
  func.func @autoencoder_kernel(%arg0: i32, %arg1: memref<8x32xf32, #tpu.memory_space<vmem>>, %arg2: memref<32x128xf32, #tpu.memory_space<vmem>>, %arg3: memref<1x128xf32, #tpu.memory_space<vmem>>, %arg4: memref<128x16xf32, #tpu.memory_space<vmem>>, %arg5: memref<1x16xf32, #tpu.memory_space<vmem>>, %arg6: memref<16x128xf32, #tpu.memory_space<vmem>>, %arg7: memref<1x128xf32, #tpu.memory_space<vmem>>, %arg8: memref<128x32xf32, #tpu.memory_space<vmem>>, %arg9: memref<1x32xf32, #tpu.memory_space<vmem>>, %arg10: memref<8x32xf32, #tpu.memory_space<vmem>>, %arg11: memref<8x16xf32, #tpu.memory_space<vmem>>) attributes {dimension_semantics = [#tpu.dimension_semantics<parallel>], iteration_bounds = array<i64: 2>, scalar_prefetch = 0 : i64, scratch_operands = 0 : i64, tpu.core_type = #tpu.core_type<tc>, window_params = [{transform_indices = @transform_0, window_bounds = array<i64: 8, 32>}, {pipeline_mode = #tpu.pipeline_mode<synchronous>, transform_indices = @transform_1, window_bounds = array<i64: 32, 128>}, {pipeline_mode = #tpu.pipeline_mode<synchronous>, transform_indices = @transform_2, window_bounds = array<i64: 1, 128>}, {pipeline_mode = #tpu.pipeline_mode<synchronous>, transform_indices = @transform_3, window_bounds = array<i64: 128, 16>}, {pipeline_mode = #tpu.pipeline_mode<synchronous>, transform_indices = @transform_4, window_bounds = array<i64: 1, 16>}, {pipeline_mode = #tpu.pipeline_mode<synchronous>, transform_indices = @transform_5, window_bounds = array<i64: 16, 128>}, {pipeline_mode = #tpu.pipeline_mode<synchronous>, transform_indices = @transform_6, window_bounds = array<i64: 1, 128>}, {pipeline_mode = #tpu.pipeline_mode<synchronous>, transform_indices = @transform_7, window_bounds = array<i64: 128, 32>}, {pipeline_mode = #tpu.pipeline_mode<synchronous>, transform_indices = @transform_8, window_bounds = array<i64: 1, 32>}, {transform_indices = @transform_9, window_bounds = array<i64: 8, 32>}, {transform_indices = @transform_10, window_bounds = array<i64: 8, 16>}]} {
    %c0 = arith.constant 0 : index
    %c0_0 = arith.constant 0 : index
    %0 = vector.load %arg1[%c0, %c0_0] : memref<8x32xf32, #tpu.memory_space<vmem>>, vector<8x32xf32>
    %c0_1 = arith.constant 0 : index
    %c0_2 = arith.constant 0 : index
    %1 = vector.load %arg2[%c0_1, %c0_2] : memref<32x128xf32, #tpu.memory_space<vmem>>, vector<32x128xf32>
    %cst = arith.constant dense<0.000000e+00> : vector<8x128xf32>
    %2 = tpu.matmul %0, %1, %cst {dimension_numbers = #tpu.dot_dimension_numbers<[1], [0], [0], [1], [0, 0, 1, 1], [], []>} : vector<8x32xf32>, vector<32x128xf32>, vector<8x128xf32> -> vector<8x128xf32>
    %c0_3 = arith.constant 0 : index
    %c0_4 = arith.constant 0 : index
    %3 = vector.load %arg3[%c0_3, %c0_4] : memref<1x128xf32, #tpu.memory_space<vmem>>, vector<1x128xf32>
    %4 = vector.broadcast %3 : vector<1x128xf32> to vector<8x128xf32>
    %5 = arith.addf %2, %4 : vector<8x128xf32>
    %cst_5 = arith.constant 0.000000e+00 : f32
    %6 = vector.broadcast %cst_5 : f32 to vector<8x128xf32>
    %7 = arith.maximumf %5, %6 : vector<8x128xf32>
    %c0_6 = arith.constant 0 : index
    %c0_7 = arith.constant 0 : index
    %8 = vector.load %arg4[%c0_6, %c0_7] : memref<128x16xf32, #tpu.memory_space<vmem>>, vector<128x16xf32>
    %cst_8 = arith.constant dense<0.000000e+00> : vector<8x16xf32>
    %9 = tpu.matmul %7, %8, %cst_8 {dimension_numbers = #tpu.dot_dimension_numbers<[1], [0], [0], [1], [0, 0, 1, 1], [], []>} : vector<8x128xf32>, vector<128x16xf32>, vector<8x16xf32> -> vector<8x16xf32>
    %c0_9 = arith.constant 0 : index
    %c0_10 = arith.constant 0 : index
    %10 = vector.load %arg5[%c0_9, %c0_10] : memref<1x16xf32, #tpu.memory_space<vmem>>, vector<1x16xf32>
    %11 = vector.broadcast %10 : vector<1x16xf32> to vector<8x16xf32>
    %12 = arith.addf %9, %11 : vector<8x16xf32>
    %c0_11 = arith.constant 0 : index
    %c0_12 = arith.constant 0 : index
    %13 = vector.load %arg6[%c0_11, %c0_12] : memref<16x128xf32, #tpu.memory_space<vmem>>, vector<16x128xf32>
    %cst_13 = arith.constant dense<0.000000e+00> : vector<8x128xf32>
    %14 = tpu.matmul %12, %13, %cst_13 {dimension_numbers = #tpu.dot_dimension_numbers<[1], [0], [0], [1], [0, 0, 1, 1], [], []>} : vector<8x16xf32>, vector<16x128xf32>, vector<8x128xf32> -> vector<8x128xf32>
    %c0_14 = arith.constant 0 : index
    %c0_15 = arith.constant 0 : index
    %15 = vector.load %arg7[%c0_14, %c0_15] : memref<1x128xf32, #tpu.memory_space<vmem>>, vector<1x128xf32>
    %16 = vector.broadcast %15 : vector<1x128xf32> to vector<8x128xf32>
    %17 = arith.addf %14, %16 : vector<8x128xf32>
    %cst_16 = arith.constant 0.000000e+00 : f32
    %18 = vector.broadcast %cst_16 : f32 to vector<8x128xf32>
    %19 = arith.maximumf %17, %18 : vector<8x128xf32>
    %c0_17 = arith.constant 0 : index
    %c0_18 = arith.constant 0 : index
    %20 = vector.load %arg8[%c0_17, %c0_18] : memref<128x32xf32, #tpu.memory_space<vmem>>, vector<128x32xf32>
    %cst_19 = arith.constant dense<0.000000e+00> : vector<8x32xf32>
    %21 = tpu.matmul %19, %20, %cst_19 {dimension_numbers = #tpu.dot_dimension_numbers<[1], [0], [0], [1], [0, 0, 1, 1], [], []>} : vector<8x128xf32>, vector<128x32xf32>, vector<8x32xf32> -> vector<8x32xf32>
    %c0_20 = arith.constant 0 : index
    %c0_21 = arith.constant 0 : index
    %22 = vector.load %arg9[%c0_20, %c0_21] : memref<1x32xf32, #tpu.memory_space<vmem>>, vector<1x32xf32>
    %23 = vector.broadcast %22 : vector<1x32xf32> to vector<8x32xf32>
    %24 = arith.addf %21, %23 : vector<8x32xf32>
    %c0_22 = arith.constant 0 : index
    %c0_23 = arith.constant 0 : index
    %25 = vector.load %arg11[%c0_22, %c0_23] : memref<8x16xf32, #tpu.memory_space<vmem>>, vector<8x16xf32>
    tpu.vector_store %arg11[%c0_22, %c0_23], %12 {strides = array<i32>} : memref<8x16xf32, #tpu.memory_space<vmem>>, vector<8x16xf32>,
    %c0_24 = arith.constant 0 : index
    %c0_25 = arith.constant 0 : index
    %26 = vector.load %arg10[%c0_24, %c0_25] : memref<8x32xf32, #tpu.memory_space<vmem>>, vector<8x32xf32>
    tpu.vector_store %arg10[%c0_24, %c0_25], %24 {strides = array<i32>} : memref<8x32xf32, #tpu.memory_space<vmem>>, vector<8x32xf32>,
    return
  }
  func.func @transform_0(%arg0: i32) -> (i32, i32) {
    %c0_i32 = arith.constant 0 : i32
    %c0_i32_0 = arith.constant 0 : i32
    return %arg0, %c0_i32 : i32, i32
  }
  func.func @transform_1(%arg0: i32) -> (i32, i32) {
    %c0_i32 = arith.constant 0 : i32
    %c0_i32_0 = arith.constant 0 : i32
    %c0_i32_1 = arith.constant 0 : i32
    return %c0_i32, %c0_i32_0 : i32, i32
  }
  func.func @transform_2(%arg0: i32) -> (i32, i32) {
    %c0_i32 = arith.constant 0 : i32
    %c0_i32_0 = arith.constant 0 : i32
    %c0_i32_1 = arith.constant 0 : i32
    return %c0_i32, %c0_i32_0 : i32, i32
  }
  func.func @transform_3(%arg0: i32) -> (i32, i32) {
    %c0_i32 = arith.constant 0 : i32
    %c0_i32_0 = arith.constant 0 : i32
    %c0_i32_1 = arith.constant 0 : i32
    return %c0_i32, %c0_i32_0 : i32, i32
  }
  func.func @transform_4(%arg0: i32) -> (i32, i32) {
    %c0_i32 = arith.constant 0 : i32
    %c0_i32_0 = arith.constant 0 : i32
    %c0_i32_1 = arith.constant 0 : i32
    return %c0_i32, %c0_i32_0 : i32, i32
  }
  func.func @transform_5(%arg0: i32) -> (i32, i32) {
    %c0_i32 = arith.constant 0 : i32
    %c0_i32_0 = arith.constant 0 : i32
    %c0_i32_1 = arith.constant 0 : i32
    return %c0_i32, %c0_i32_0 : i32, i32
  }
  func.func @transform_6(%arg0: i32) -> (i32, i32) {
    %c0_i32 = arith.constant 0 : i32
    %c0_i32_0 = arith.constant 0 : i32
    %c0_i32_1 = arith.constant 0 : i32
    return %c0_i32, %c0_i32_0 : i32, i32
  }
  func.func @transform_7(%arg0: i32) -> (i32, i32) {
    %c0_i32 = arith.constant 0 : i32
    %c0_i32_0 = arith.constant 0 : i32
    %c0_i32_1 = arith.constant 0 : i32
    return %c0_i32, %c0_i32_0 : i32, i32
  }
  func.func @transform_8(%arg0: i32) -> (i32, i32) {
    %c0_i32 = arith.constant 0 : i32
    %c0_i32_0 = arith.constant 0 : i32
    %c0_i32_1 = arith.constant 0 : i32
    return %c0_i32, %c0_i32_0 : i32, i32
  }
  func.func @transform_9(%arg0: i32) -> (i32, i32) {
    %c0_i32 = arith.constant 0 : i32
    %c0_i32_0 = arith.constant 0 : i32
    return %arg0, %c0_i32 : i32, i32
  }
  func.func @transform_10(%arg0: i32) -> (i32, i32) {
    %c0_i32 = arith.constant 0 : i32
    %c0_i32_0 = arith.constant 0 : i32
    return %arg0, %c0_i32 : i32, i32
  }
}

</mosaic_0001>

<llo_original>
// kernel: tpu_custom_call.1
$region0: #{tpu_custom_call.1}
  #allocation0 [shape = 'u32[]', space=smem, size = 0x4, offset = 0x4, fixed_abs, tag = 'smem constant byte address 0x4 - core index']
  #allocation1 [shape = 'u32[72,128]{1,0:T(1,128)}', space=vmem, size = 0x9000, scoped, tag = 'internal scratch']
  %s0 = inlined_call_operand.vmem [shape: f32[16,32], index: 0, kind: input, shape index: {}]
  %s1 = inlined_call_operand.vmem [shape: f32[32,128], index: 1, kind: input, shape index: {}]
  %s2 = inlined_call_operand.vmem [shape: f32[1,128], index: 2, kind: input, shape index: {}]
  %s3 = inlined_call_operand.vmem [shape: f32[128,16], index: 3, kind: input, shape index: {}]
  %s4 = inlined_call_operand.vmem [shape: f32[1,16], index: 4, kind: input, shape index: {}]
  %s5 = inlined_call_operand.vmem [shape: f32[16,128], index: 5, kind: input, shape index: {}]
  %s6 = inlined_call_operand.vmem [shape: f32[1,128], index: 6, kind: input, shape index: {}]
  %s7 = inlined_call_operand.vmem [shape: f32[128,32], index: 7, kind: input, shape index: {}]
  %s8 = inlined_call_operand.vmem [shape: f32[1,32], index: 8, kind: input, shape index: {}]
  %s9 = inlined_call_operand.hbm [shape: f32[16,32], index: 9, kind: output, shape index: {0}]
  %s10 = inlined_call_operand.hbm [shape: f32[16,16], index: 10, kind: output, shape index: {1}]
  %11 = xla_tuple %s9, %s10
  %s12 = sld [smem:[#allocation0]]
  $region77: #{tpu_custom_call.1} parent=0
    _
  %s14 = ssub.s32 1, %s12
  %s15 = scalar_select 0, %s14, %s12
  $region1: #{tpu_custom_call.1} parent=0
    #allocation2 [shape = 'u8[8192]{0}', space=vmem, size = 0x2000, scoped, tag = 'output window, operand 0']
    #allocation3 [shape = 's32[2]{0}', space=sflag, size = 0x8, scoped, tag = 'scoped memory for tpu_custom_call.1']
    #allocation4 [shape = 'u8[8192]{0}', space=vmem, size = 0x2000, scoped, tag = 'output window, operand 1']
    #allocation5 [shape = 's32[2]{0}', space=sflag, size = 0x8, scoped, tag = 'scoped memory for tpu_custom_call.1']
    %16 = vsyncpa [#allocation3], 0
    %s17 = scalar_lea.sflag [#allocation3], 1
    %18 = vsyncpa %s17, 0
    %19 = vsyncpa [#allocation5], 0
    %s20 = scalar_lea.sflag [#allocation5], 1
    %21 = vsyncpa %s20, 0
    loop: start=0, step=1, limit=4
    $region2: #{tpu_custom_call.1} parent=1 // loop_pre_header
      _
    $region3: #{tpu_custom_call.1} parent=1 // loop_header
      %s23 = sphi 0, %s27
      %p24 = scmp.ge.s32.totalorder %s23, 4
      %s33 = sphi 0, %s35
      %s36 = sphi 0, %s33
      %s37 = sphi 0, %s36
      %s53 = sphi 0, %s37
      %s57 = sphi 0, %s57
      %s59 = sphi 0, %s57
      %s60 = sphi 0, %s59
      %s74 = sphi 0, %s60
      %s78 = sphi 0, %s78
      %s80 = sphi 0, %s78
      %s81 = sphi 0, %s80
      %s95 = sphi 0, %s81
      %s99 = sphi 0, %s99
      %s101 = sphi 0, %s99
      %s102 = sphi 0, %s101
      %s116 = sphi 0, %s102
      %s120 = sphi 0, %s120
      %s122 = sphi 0, %s120
      %s123 = sphi 0, %s122
      %s137 = sphi 0, %s123
      %s141 = sphi 0, %s141
      %s143 = sphi 0, %s141
      %s144 = sphi 0, %s143
      %s158 = sphi 0, %s144
      %s162 = sphi 0, %s162
      %s164 = sphi 0, %s162
      %s165 = sphi 0, %s164
      %s179 = sphi 0, %s165
      %s183 = sphi 0, %s183
      %s185 = sphi 0, %s183
      %s186 = sphi 0, %s185
      %s200 = sphi 0, %s186
      %s204 = sphi 0, %s204
      %s206 = sphi 0, %s204
      %s207 = sphi 0, %s206
      %s221 = sphi 0, %s207
      %s227 = sphi 0, %s229
      %s230 = sphi 0, %s227
      %s231 = sphi 0, %s230
      %s247 = sphi 0, %s231
      %s253 = sphi 0, %s255
      %s256 = sphi 0, %s253
      %s257 = sphi 0, %s256
      %s273 = sphi 0, %s257
    $region4: #{tpu_custom_call.1} parent=1 // loop_header_branch
      %26 = sbr.rel (%p24) target = $region8
    $region5: #{tpu_custom_call.1} parent=1 // loop_body
      %s28 = ssub.s32 %s23, 1
      %s29 = ssub.s32 %s23, 2
      %s30 = sadd.s32 %s23, 1
      %s31 = ssub.s32 %s23, %s30
      %p32 = scmp.eq.s32.totalorder %s31, 0
      %s34 = sadd.s32 %s33, 1
      %s35 = scalar_select %p32, %s33, %s34
      %p38 = pneg %p32
      %p39 = scmp.eq.s32.totalorder %s23, 1
      %p40 = por %p38, %p39
      %p41 = scmp.ne.s32.totalorder %s33, %s36
      %p42 = scmp.eq.s32.totalorder %s23, 0
      %p43 = por %p41, %p42
      %p44 = scmp.ne.s32.totalorder %s33, %s36
      %p45 = scmp.eq.s32.totalorder %s28, 1
      %p46 = por %p44, %p45
      %p47 = scmp.ne.s32.totalorder %s36, %s37
      %p48 = scmp.eq.s32.totalorder %s28, 0
      %p49 = por %p47, %p48
      %p50 = scmp.ne.s32.totalorder %s36, %s37
      %p51 = scmp.eq.s32.totalorder %s29, 1
      %p52 = por %p50, %p51
      %p54 = scmp.ne.s32.totalorder %s37, %s53
      %p55 = scmp.eq.s32.totalorder %s29, 0
      %p56 = por %p54, %p55
      %s58 = sadd.s32 %s57, 1
      %p61 = scmp.eq.s32.totalorder %s23, 1
      %p62 = scmp.ne.s32.totalorder %s57, %s59
      %p63 = scmp.eq.s32.totalorder %s23, 0
      %p64 = por %p62, %p63
      %p65 = scmp.ne.s32.totalorder %s57, %s59
      %p66 = scmp.eq.s32.totalorder %s28, 1
      %p67 = por %p65, %p66
      %p68 = scmp.ne.s32.totalorder %s59, %s60
      %p69 = scmp.eq.s32.totalorder %s28, 0
      %p70 = por %p68, %p69
      %p71 = scmp.ne.s32.totalorder %s59, %s60
      %p72 = scmp.eq.s32.totalorder %s29, 1
      %p73 = por %p71, %p72
      %p75 = scmp.ne.s32.totalorder %s60, %s74
      %p76 = scmp.eq.s32.totalorder %s29, 0
      %p77 = por %p75, %p76
      %s79 = sadd.s32 %s78, 1
      %p82 = scmp.eq.s32.totalorder %s23, 1
      %p83 = scmp.ne.s32.totalorder %s78, %s80
      %p84 = scmp.eq.s32.totalorder %s23, 0
      %p85 = por %p83, %p84
      %p86 = scmp.ne.s32.totalorder %s78, %s80
      %p87 = scmp.eq.s32.totalorder %s28, 1
      %p88 = por %p86, %p87
      %p89 = scmp.ne.s32.totalorder %s80, %s81
      %p90 = scmp.eq.s32.totalorder %s28, 0
      %p91 = por %p89, %p90
      %p92 = scmp.ne.s32.totalorder %s80, %s81
      %p93 = scmp.eq.s32.totalorder %s29, 1
      %p94 = por %p92, %p93
      %p96 = scmp.ne.s32.totalorder %s81, %s95
      %p97 = scmp.eq.s32.totalorder %s29, 0
      %p98 = por %p96, %p97
      %s100 = sadd.s32 %s99, 1
      %p103 = scmp.eq.s32.totalorder %s23, 1
      %p104 = scmp.ne.s32.totalorder %s99, %s101
      %p105 = scmp.eq.s32.totalorder %s23, 0
      %p106 = por %p104, %p105
      %p107 = scmp.ne.s32.totalorder %s99, %s101
      %p108 = scmp.eq.s32.totalorder %s28, 1
      %p109 = por %p107, %p108
      %p110 = scmp.ne.s32.totalorder %s101, %s102
      %p111 = scmp.eq.s32.totalorder %s28, 0
      %p112 = por %p110, %p111
      %p113 = scmp.ne.s32.totalorder %s101, %s102
      %p114 = scmp.eq.s32.totalorder %s29, 1
      %p115 = por %p113, %p114
      %p117 = scmp.ne.s32.totalorder %s102, %s116
      %p118 = scmp.eq.s32.totalorder %s29, 0
      %p119 = por %p117, %p118
      %s121 = sadd.s32 %s120, 1
      %p124 = scmp.eq.s32.totalorder %s23, 1
      %p125 = scmp.ne.s32.totalorder %s120, %s122
      %p126 = scmp.eq.s32.totalorder %s23, 0
      %p127 = por %p125, %p126
      %p128 = scmp.ne.s32.totalorder %s120, %s122
      %p129 = scmp.eq.s32.totalorder %s28, 1
      %p130 = por %p128, %p129
      %p131 = scmp.ne.s32.totalorder %s122, %s123
      %p132 = scmp.eq.s32.totalorder %s28, 0
      %p133 = por %p131, %p132
      %p134 = scmp.ne.s32.totalorder %s122, %s123
      %p135 = scmp.eq.s32.totalorder %s29, 1
      %p136 = por %p134, %p135
      %p138 = scmp.ne.s32.totalorder %s123, %s137
      %p139 = scmp.eq.s32.totalorder %s29, 0
      %p140 = por %p138, %p139
      %s142 = sadd.s32 %s141, 1
      %p145 = scmp.eq.s32.totalorder %s23, 1
      %p146 = scmp.ne.s32.totalorder %s141, %s143
      %p147 = scmp.eq.s32.totalorder %s23, 0
      %p148 = por %p146, %p147
      %p149 = scmp.ne.s32.totalorder %s141, %s143
      %p150 = scmp.eq.s32.totalorder %s28, 1
      %p151 = por %p149, %p150
      %p152 = scmp.ne.s32.totalorder %s143, %s144
      %p153 = scmp.eq.s32.totalorder %s28, 0
      %p154 = por %p152, %p153
      %p155 = scmp.ne.s32.totalorder %s143, %s144
      %p156 = scmp.eq.s32.totalorder %s29, 1
      %p157 = por %p155, %p156
      %p159 = scmp.ne.s32.totalorder %s144, %s158
      %p160 = scmp.eq.s32.totalorder %s29, 0
      %p161 = por %p159, %p160
      %s163 = sadd.s32 %s162, 1
      %p166 = scmp.eq.s32.totalorder %s23, 1
      %p167 = scmp.ne.s32.totalorder %s162, %s164
      %p168 = scmp.eq.s32.totalorder %s23, 0
      %p169 = por %p167, %p168
      %p170 = scmp.ne.s32.totalorder %s162, %s164
      %p171 = scmp.eq.s32.totalorder %s28, 1
      %p172 = por %p170, %p171
      %p173 = scmp.ne.s32.totalorder %s164, %s165
      %p174 = scmp.eq.s32.totalorder %s28, 0
      %p175 = por %p173, %p174
      %p176 = scmp.ne.s32.totalorder %s164, %s165
      %p177 = scmp.eq.s32.totalorder %s29, 1
      %p178 = por %p176, %p177
      %p180 = scmp.ne.s32.totalorder %s165, %s179
      %p181 = scmp.eq.s32.totalorder %s29, 0
      %p182 = por %p180, %p181
      %s184 = sadd.s32 %s183, 1
      %p187 = scmp.eq.s32.totalorder %s23, 1
      %p188 = scmp.ne.s32.totalorder %s183, %s185
      %p189 = scmp.eq.s32.totalorder %s23, 0
      %p190 = por %p188, %p189
      %p191 = scmp.ne.s32.totalorder %s183, %s185
      %p192 = scmp.eq.s32.totalorder %s28, 1
      %p193 = por %p191, %p192
      %p194 = scmp.ne.s32.totalorder %s185, %s186
      %p195 = scmp.eq.s32.totalorder %s28, 0
      %p196 = por %p194, %p195
      %p197 = scmp.ne.s32.totalorder %s185, %s186
      %p198 = scmp.eq.s32.totalorder %s29, 1
      %p199 = por %p197, %p198
      %p201 = scmp.ne.s32.totalorder %s186, %s200
      %p202 = scmp.eq.s32.totalorder %s29, 0
      %p203 = por %p201, %p202
      %s205 = sadd.s32 %s204, 1
      %p208 = scmp.eq.s32.totalorder %s23, 1
      %p209 = scmp.ne.s32.totalorder %s204, %s206
      %p210 = scmp.eq.s32.totalorder %s23, 0
      %p211 = por %p209, %p210
      %p212 = scmp.ne.s32.totalorder %s204, %s206
      %p213 = scmp.eq.s32.totalorder %s28, 1
      %p214 = por %p212, %p213
      %p215 = scmp.ne.s32.totalorder %s206, %s207
      %p216 = scmp.eq.s32.totalorder %s28, 0
      %p217 = por %p215, %p216
      %p218 = scmp.ne.s32.totalorder %s206, %s207
      %p219 = scmp.eq.s32.totalorder %s29, 1
      %p220 = por %p218, %p219
      %p222 = scmp.ne.s32.totalorder %s207, %s221
      %p223 = scmp.eq.s32.totalorder %s29, 0
      %p224 = por %p222, %p223
      %s225 = ssub.s32 %s23, %s30
      %p226 = scmp.eq.s32.totalorder %s225, 0
      %s228 = sadd.s32 %s227, 1
      %s229 = scalar_select %p226, %s227, %s228
      %p232 = pneg %p226
      %p233 = scmp.eq.s32.totalorder %s23, 1
      %p234 = por %p232, %p233
      %p235 = scmp.ne.s32.totalorder %s227, %s230
      %p236 = scmp.eq.s32.totalorder %s23, 0
      %p237 = por %p235, %p236
      %p238 = scmp.ne.s32.totalorder %s227, %s230
      %p239 = scmp.eq.s32.totalorder %s28, 1
      %p240 = por %p238, %p239
      %p241 = scmp.ne.s32.totalorder %s230, %s231
      %p242 = scmp.eq.s32.totalorder %s28, 0
      %p243 = por %p241, %p242
      %p244 = scmp.ne.s32.totalorder %s230, %s231
      %p245 = scmp.eq.s32.totalorder %s29, 1
      %p246 = por %p244, %p245
      %p248 = scmp.ne.s32.totalorder %s231, %s247
      %p249 = scmp.eq.s32.totalorder %s29, 0
      %p250 = por %p248, %p249
      %s251 = ssub.s32 %s23, %s30
      %p252 = scmp.eq.s32.totalorder %s251, 0
      %s254 = sadd.s32 %s253, 1
      %s255 = scalar_select %p252, %s253, %s254
      %p258 = pneg %p252
      %p259 = scmp.eq.s32.totalorder %s23, 1
      %p260 = por %p258, %p259
      %p261 = scmp.ne.s32.totalorder %s253, %s256
      %p262 = scmp.eq.s32.totalorder %s23, 0
      %p263 = por %p261, %p262
      %p264 = scmp.ne.s32.totalorder %s253, %s256
      %p265 = scmp.eq.s32.totalorder %s28, 1
      %p266 = por %p264, %p265
      %p267 = scmp.ne.s32.totalorder %s256, %s257
      %p268 = scmp.eq.s32.totalorder %s28, 0
      %p269 = por %p267, %p268
      %p270 = scmp.ne.s32.totalorder %s256, %s257
      %p271 = scmp.eq.s32.totalorder %s29, 1
      %p272 = por %p270, %p271
      %p274 = scmp.ne.s32.totalorder %s257, %s273
      %p275 = scmp.eq.s32.totalorder %s29, 0
      %p276 = por %p274, %p275
      %p277 = scmp.le.s32.totalorder 1, %s23
      %p278 = scmp.lt.s32.totalorder %s23, 3
      %p279 = pnand %p277, %p278
      %p280 = pneg %p279
      // Predicated region
      $region9: #{tpu_custom_call.1} parent=5 // pred_check
        _
      $region10: #{tpu_custom_call.1} parent=5 // pred_check_branch
        %282 = sbr.rel (%p279) target = $region12
      $region11: #{tpu_custom_call.1} parent=5 // pred_region
        %s283 = ssub.s32 %s23, 1
        // Predicated region
        $region13: #{tpu_custom_call.1} parent=11 // pred_check
          %p284 = pneg %p70
        $region14: #{tpu_custom_call.1} parent=11 // pred_check_branch
          %286 = sbr.rel (%p284) target = $region16
        $region15: #{tpu_custom_call.1} parent=11 // pred_region
          _
        $region16: #{tpu_custom_call.1} parent=11 // pred_fallthru
          _
        // Predicated region
        $region17: #{tpu_custom_call.1} parent=11 // pred_check
          %p287 = pneg %p91
        $region18: #{tpu_custom_call.1} parent=11 // pred_check_branch
          %289 = sbr.rel (%p287) target = $region20
        $region19: #{tpu_custom_call.1} parent=11 // pred_region
          _
        $region20: #{tpu_custom_call.1} parent=11 // pred_fallthru
          _
        // Predicated region
        $region21: #{tpu_custom_call.1} parent=11 // pred_check
          %p290 = pneg %p112
        $region22: #{tpu_custom_call.1} parent=11 // pred_check_branch
          %292 = sbr.rel (%p290) target = $region24
        $region23: #{tpu_custom_call.1} parent=11 // pred_region
          _
        $region24: #{tpu_custom_call.1} parent=11 // pred_fallthru
          _
        // Predicated region
        $region25: #{tpu_custom_call.1} parent=11 // pred_check
          %p293 = pneg %p133
        $region26: #{tpu_custom_call.1} parent=11 // pred_check_branch
          %295 = sbr.rel (%p293) target = $region28
        $region27: #{tpu_custom_call.1} parent=11 // pred_region
          _
        $region28: #{tpu_custom_call.1} parent=11 // pred_fallthru
          _
        // Predicated region
        $region29: #{tpu_custom_call.1} parent=11 // pred_check
          %p296 = pneg %p154
        $region30: #{tpu_custom_call.1} parent=11 // pred_check_branch
          %298 = sbr.rel (%p296) target = $region32
        $region31: #{tpu_custom_call.1} parent=11 // pred_region
          _
        $region32: #{tpu_custom_call.1} parent=11 // pred_fallthru
          _
        // Predicated region
        $region33: #{tpu_custom_call.1} parent=11 // pred_check
          %p299 = pneg %p175
        $region34: #{tpu_custom_call.1} parent=11 // pred_check_branch
          %301 = sbr.rel (%p299) target = $region36
        $region35: #{tpu_custom_call.1} parent=11 // pred_region
          _
        $region36: #{tpu_custom_call.1} parent=11 // pred_fallthru
          _
        // Predicated region
        $region37: #{tpu_custom_call.1} parent=11 // pred_check
          %p302 = pneg %p196
        $region38: #{tpu_custom_call.1} parent=11 // pred_check_branch
          %304 = sbr.rel (%p302) target = $region40
        $region39: #{tpu_custom_call.1} parent=11 // pred_region
          _
        $region40: #{tpu_custom_call.1} parent=11 // pred_fallthru
          _
        // Predicated region
        $region41: #{tpu_custom_call.1} parent=11 // pred_check
          %p305 = pneg %p217
        $region42: #{tpu_custom_call.1} parent=11 // pred_check_branch
          %307 = sbr.rel (%p305) target = $region44
        $region43: #{tpu_custom_call.1} parent=11 // pred_region
          _
        $region44: #{tpu_custom_call.1} parent=11 // pred_fallthru
          _
      $region12: #{tpu_custom_call.1} parent=5 // pred_fallthru
        _
      %p308 = scmp.lt.s32.totalorder %s23, 2
      // Predicated region
      $region45: #{tpu_custom_call.1} parent=5 // pred_check
        %p309 = pneg %p308
      $region46: #{tpu_custom_call.1} parent=5 // pred_check_branch
        %311 = sbr.rel (%p309) target = $region48
      $region47: #{tpu_custom_call.1} parent=5 // pred_region
        // Predicated region
        $region49: #{tpu_custom_call.1} parent=47 // pred_check
          %p312 = pneg %p43
        $region50: #{tpu_custom_call.1} parent=47 // pred_check_branch
          %314 = sbr.rel (%p312) target = $region52
        $region51: #{tpu_custom_call.1} parent=47 // pred_region
          %p315 = scmp.lt.s32.totalorder %s23, 1
          %s316 = scalar_select %p315, %s23, 1
          %s317 = smul.addr %s316, 8
          %s318 = scalar_lea.vmem %s0, %s317
        $region52: #{tpu_custom_call.1} parent=47 // pred_fallthru
          _
      $region48: #{tpu_custom_call.1} parent=5 // pred_fallthru
        _
      %p319 = scmp.le.s32.totalorder 1, %s23
      %p320 = scmp.lt.s32.totalorder %s23, 3
      %p321 = pnand %p319, %p320
      %p322 = pneg %p321
      // Predicated region
      $region53: #{tpu_custom_call.1} parent=5 // pred_check
        _
      $region54: #{tpu_custom_call.1} parent=5 // pred_check_branch
        %324 = sbr.rel (%p321) target = $region56
      $region55: #{tpu_custom_call.1} parent=5 // pred_region
        %s325 = ssub.s32 %s23, 1
        %p326 = scmp.lt.s32.totalorder %s28, 1
        %s327 = scalar_select %p326, %s28, 1
        %s328 = smul.addr %s327, 8
        %s329 = scalar_lea.vmem %s0, %s328
        %p330 = pneg %p49
        %p331 = pneg %p46
        %p332 = pneg %p70
        %p333 = pneg %p67
        %p334 = pneg %p91
        %p335 = pneg %p88
        %p336 = pneg %p112
        %p337 = pneg %p109
        %p338 = pneg %p133
        %p339 = pneg %p130
        %p340 = pneg %p154
        %p341 = pneg %p151
        %p342 = pneg %p175
        %p343 = pneg %p172
        %p344 = pneg %p196
        %p345 = pneg %p193
        %p346 = pneg %p217
        %p347 = pneg %p214
        %p348 = pneg %p243
        %p349 = pneg %p240
        %s350 = sand.u32 %s230, 1
        %s351 = scalar_lea.sflag [#allocation3], %s350
        %s352 = sand.u32 %s230, 1
        %s353 = smul.addr %s352, 8
        %s354 = scalar_lea.vmem [#allocation2], %s353
        %p355 = pneg %p269
        %p356 = pneg %p266
        %s357 = sand.u32 %s256, 1
        %s358 = scalar_lea.sflag [#allocation5], %s357
        %s359 = sand.u32 %s256, 1
        %s360 = smul.addr %s359, 8
        %s361 = scalar_lea.vmem [#allocation4], %s360
        %p362 = scmp.lt.s32.totalorder %s28, 1
        %s363 = scalar_select %p362, %s28, 1
        %s364 = smul.addr %s363, 8
        %s365 = scalar_lea.vmem %s0, %s364
        %v366 = vld [vmem:[%s365] sm:$0xff]
        %v367 = vld [vmem:[%s1] sm:$0xff]
        %v368 = vld [vmem:[%s1 + $0x8] sm:$0xff]
        %v369 = vld [vmem:[%s1 + $0x10] sm:$0xff]
        %v370 = vld [vmem:[%s1 + $0x18] sm:$0xff]
        %v371 = vld [vmem:[%s2] sm:$0x1]
        %v373 = vperm.slane %v371, 0
        %vm375 = vcmask 261120
        %v377 = vsel %vm375, %v366, 0
        %379 = vmatpush.msra.mxu0 0.0
        %380 = vmatpush.msra.mxu0 0.0
        %381 = vmatpush.msra.mxu0 0.0
        %382 = vmatpush.msra.mxu0 0.0
        %383 = vmatpush.msra.mxu0 0.0
        %384 = vmatpush.msra.mxu0 0.0
        %385 = vmatpush.msra.mxu0 0.0
        %386 = vmatpush.msra.mxu0 0.0
        %387 = vmatpush.msra.mxu0 0.0
        %388 = vmatpush.msra.mxu0 0.0
        %389 = vmatpush.msra.mxu0 0.0
        %390 = vmatpush.msra.mxu0 0.0
        %391 = vmatpush.msra.mxu0 %v370
        %392 = vmatpush.msra.mxu0 %v369
        %393 = vmatpush.msra.mxu0 %v368
        %394 = vmatpush.msra.mxu0 %v367
        %395 = vmatmul.f32.gmra.mxu0 %v377
        %v396 = vpop.f32.mrf.mxu0
        %v397 = vadd.f32 %v373, %v396
        %398 = vdwg.mxu0
        %v399 = vmax.f32 %v397, 0.0
        %v400 = vld [vmem:[%s3] sm:$0xff]
        %v401 = vld [vmem:[%s3 + $0x8] sm:$0xff]
        %v402 = vld [vmem:[%s3 + $0x10] sm:$0xff]
        %v403 = vld [vmem:[%s3 + $0x18] sm:$0xff]
        %v404 = vld [vmem:[%s3 + $0x20] sm:$0xff]
        %v405 = vld [vmem:[%s3 + $0x28] sm:$0xff]
        %v406 = vld [vmem:[%s3 + $0x30] sm:$0xff]
        %v407 = vld [vmem:[%s3 + $0x38] sm:$0xff]
        %v408 = vld [vmem:[%s3 + $0x40] sm:$0xff]
        %v409 = vld [vmem:[%s3 + $0x48] sm:$0xff]
        %v410 = vld [vmem:[%s3 + $0x50] sm:$0xff]
        %v411 = vld [vmem:[%s3 + $0x58] sm:$0xff]
        %v412 = vld [vmem:[%s3 + $0x60] sm:$0xff]
        %v413 = vld [vmem:[%s3 + $0x68] sm:$0xff]
        %v414 = vld [vmem:[%s3 + $0x70] sm:$0xff]
        %v415 = vld [vmem:[%s3 + $0x78] sm:$0xff]
        %v416 = vld [vmem:[%s4] sm:$0x1]
        %v418 = vperm.slane %v416, 0
        %420 = vmatpush.msra.mxu0 %v415
        %421 = vmatpush.msra.mxu0 %v414
        %422 = vmatpush.msra.mxu0 %v413
        %423 = vmatpush.msra.mxu0 %v412
        %424 = vmatpush.msra.mxu0 %v411
        %425 = vmatpush.msra.mxu0 %v410
        %426 = vmatpush.msra.mxu0 %v409
        %427 = vmatpush.msra.mxu0 %v408
        %428 = vmatpush.msra.mxu0 %v407
        %429 = vmatpush.msra.mxu0 %v406
        %430 = vmatpush.msra.mxu0 %v405
        %431 = vmatpush.msra.mxu0 %v404
        %432 = vmatpush.msra.mxu0 %v403
        %433 = vmatpush.msra.mxu0 %v402
        %434 = vmatpush.msra.mxu0 %v401
        %435 = vmatpush.msra.mxu0 %v400
        %436 = vmatmul.f32.gmra.mxu0 %v399
        %v437 = vpop.f32.mrf.mxu0
        %v438 = vadd.f32 %v418, %v437
        %439 = vdwg.mxu0
        %v440 = vld [vmem:[%s5] sm:$0xff]
        %v441 = vld [vmem:[%s5 + $0x8] sm:$0xff]
        %v442 = vld [vmem:[%s6] sm:$0x1]
        %v444 = vperm.slane %v442, 0
        %vm446 = vcmask 130048
        %v448 = vsel %vm446, %v438, 0
        %450 = vmatpush.msra.mxu0 0.0
        %451 = vmatpush.msra.mxu0 0.0
        %452 = vmatpush.msra.mxu0 0.0
        %453 = vmatpush.msra.mxu0 0.0
        %454 = vmatpush.msra.mxu0 0.0
        %455 = vmatpush.msra.mxu0 0.0
        %456 = vmatpush.msra.mxu0 0.0
        %457 = vmatpush.msra.mxu0 0.0
        %458 = vmatpush.msra.mxu0 0.0
        %459 = vmatpush.msra.mxu0 0.0
        %460 = vmatpush.msra.mxu0 0.0
        %461 = vmatpush.msra.mxu0 0.0
        %462 = vmatpush.msra.mxu0 0.0
        %463 = vmatpush.msra.mxu0 0.0
        %464 = vmatpush.msra.mxu0 %v441
        %465 = vmatpush.msra.mxu0 %v440
        %466 = vmatmul.f32.gmra.mxu0 %v448
        %v467 = vpop.f32.mrf.mxu0
        %v468 = vadd.f32 %v444, %v467
        %469 = vdwg.mxu0
        %v470 = vmax.f32 %v468, 0.0
        %v471 = vld [vmem:[%s7] sm:$0xff]
        %v472 = vld [vmem:[%s7 + $0x8] sm:$0xff]
        %v473 = vld [vmem:[%s7 + $0x10] sm:$0xff]
        %v474 = vld [vmem:[%s7 + $0x18] sm:$0xff]
        %v475 = vld [vmem:[%s7 + $0x20] sm:$0xff]
        %v476 = vld [vmem:[%s7 + $0x28] sm:$0xff]
        %v477 = vld [vmem:[%s7 + $0x30] sm:$0xff]
        %v478 = vld [vmem:[%s7 + $0x38] sm:$0xff]
        %v479 = vld [vmem:[%s7 + $0x40] sm:$0xff]
        %v480 = vld [vmem:[%s7 + $0x48] sm:$0xff]
        %v481 = vld [vmem:[%s7 + $0x50] sm:$0xff]
        %v482 = vld [vmem:[%s7 + $0x58] sm:$0xff]
        %v483 = vld [vmem:[%s7 + $0x60] sm:$0xff]
        %v484 = vld [vmem:[%s7 + $0x68] sm:$0xff]
        %v485 = vld [vmem:[%s7 + $0x70] sm:$0xff]
        %v486 = vld [vmem:[%s7 + $0x78] sm:$0xff]
        %v487 = vld [vmem:[%s8] sm:$0x1]
        %v489 = vperm.slane %v487, 0
        %491 = vmatpush.msra.mxu0 %v486
        %492 = vmatpush.msra.mxu0 %v485
        %493 = vmatpush.msra.mxu0 %v484
        %494 = vmatpush.msra.mxu0 %v483
        %495 = vmatpush.msra.mxu0 %v482
        %496 = vmatpush.msra.mxu0 %v481
        %497 = vmatpush.msra.mxu0 %v480
        %498 = vmatpush.msra.mxu0 %v479
        %499 = vmatpush.msra.mxu0 %v478
        %500 = vmatpush.msra.mxu0 %v477
        %501 = vmatpush.msra.mxu0 %v476
        %502 = vmatpush.msra.mxu0 %v475
        %503 = vmatpush.msra.mxu0 %v474
        %504 = vmatpush.msra.mxu0 %v473
        %505 = vmatpush.msra.mxu0 %v472
        %506 = vmatpush.msra.mxu0 %v471
        %507 = vmatmul.f32.gmra.mxu0 %v470
        %v508 = vpop.f32.mrf.mxu0
        %v509 = vadd.f32 %v489, %v508
        %510 = vdwg.mxu0
        %511 = vst.msk [vmem:[%s361] sm:$0xff] %vm446, %v438
        %512 = vst.msk [vmem:[%s354] sm:$0xff] %vm375, %v509
        %s513 = sand.u32 %s230, 1
        %s514 = scalar_lea.sflag [#allocation3], %s513
        %s515 = sand.u32 %s230, 1
        %s516 = smul.addr %s515, 8
        %s517 = scalar_lea.vmem [#allocation2], %s516
        %s518 = sand.u32 %s256, 1
        %s519 = scalar_lea.sflag [#allocation5], %s518
        %s520 = sand.u32 %s256, 1
        %s521 = smul.addr %s520, 8
        %s522 = scalar_lea.vmem [#allocation4], %s521
        // Predicated region
        $region57: #{tpu_custom_call.1} parent=55 // pred_check
          %p523 = pneg %p240
        $region58: #{tpu_custom_call.1} parent=55 // pred_check_branch
          %525 = sbr.rel (%p523) target = $region60
        $region59: #{tpu_custom_call.1} parent=55 // pred_region
          %527 = vsyncadd %s514, 0
          %s528 = smul.addr %s28, 8
          %s529 = scalar_lea.hbm %s9, %s528
          %s531 = sshll.u32 %s517, 4
          %s532 = int_to_ptr.vmem [resolvable:$true] %s531
          %s533 = sshll.u32 %s529, 4
          %s534 = int_to_ptr.hbm [resolvable:$true] %s533
          %536 = dma.vmem_to_hbm [thread:$0]  %s532, 128, %s534, %s514
        $region60: #{tpu_custom_call.1} parent=55 // pred_fallthru
          _
        // Predicated region
        $region61: #{tpu_custom_call.1} parent=55 // pred_check
          %p537 = pneg %p266
        $region62: #{tpu_custom_call.1} parent=55 // pred_check_branch
          %539 = sbr.rel (%p537) target = $region64
        $region63: #{tpu_custom_call.1} parent=55 // pred_region
          %541 = vsyncadd %s519, 0
          %s542 = smul.addr %s28, 8
          %s543 = scalar_lea.hbm %s10, %s542
          %s545 = sshll.u32 %s522, 4
          %s546 = int_to_ptr.vmem [resolvable:$true] %s545
          %s547 = sshll.u32 %s543, 4
          %s548 = int_to_ptr.hbm [resolvable:$true] %s547
          %550 = dma.vmem_to_hbm [thread:$0]  %s546, 128, %s548, %s519
        $region64: #{tpu_custom_call.1} parent=55 // pred_fallthru
          _
      $region56: #{tpu_custom_call.1} parent=5 // pred_fallthru
        _
      %p551 = scmp.le.s32.totalorder 2, %s23
      // Predicated region
      $region65: #{tpu_custom_call.1} parent=5 // pred_check
        %p552 = pneg %p551
      $region66: #{tpu_custom_call.1} parent=5 // pred_check_branch
        %554 = sbr.rel (%p552) target = $region68
      $region67: #{tpu_custom_call.1} parent=5 // pred_region
        %s555 = ssub.s32 %s23, 2
        // Predicated region
        $region69: #{tpu_custom_call.1} parent=67 // pred_check
          %p556 = pneg %p246
        $region70: #{tpu_custom_call.1} parent=67 // pred_check_branch
          %558 = sbr.rel (%p556) target = $region72
        $region71: #{tpu_custom_call.1} parent=67 // pred_region
          %s559 = sand.u32 %s231, 1
          %s560 = scalar_lea.sflag [#allocation3], %s559
          %s561 = sand.u32 %s231, 1
          %s562 = smul.addr %s561, 8
          %s563 = scalar_lea.vmem [#allocation2], %s562
          %565 = dma.done %s560, 128
        $region72: #{tpu_custom_call.1} parent=67 // pred_fallthru
          _
        // Predicated region
        $region73: #{tpu_custom_call.1} parent=67 // pred_check
          %p566 = pneg %p272
        $region74: #{tpu_custom_call.1} parent=67 // pred_check_branch
          %568 = sbr.rel (%p566) target = $region76
        $region75: #{tpu_custom_call.1} parent=67 // pred_region
          %s569 = sand.u32 %s257, 1
          %s570 = scalar_lea.sflag [#allocation5], %s569
          %s571 = sand.u32 %s257, 1
          %s572 = smul.addr %s571, 8
          %s573 = scalar_lea.vmem [#allocation4], %s572
          %575 = dma.done %s570, 128
        $region76: #{tpu_custom_call.1} parent=67 // pred_fallthru
          _
      $region68: #{tpu_custom_call.1} parent=5 // pred_fallthru
        _
    $region6: #{tpu_custom_call.1} parent=1 // loop_footer
      %s27 = sadd.s32 1, %s23
    $region7: #{tpu_custom_call.1} parent=1 // loop_footer_branch
      %22 = sbr.rel target = $region3
    $region8: #{tpu_custom_call.1} parent=1 // loop_exit
      _
    %576 = vsyncpa [#allocation3], 1
    %s577 = scalar_lea.sflag [#allocation3], 1
    %578 = vsyncpa %s577, 1
    %579 = vsyncpa [#allocation5], 1
    %s580 = scalar_lea.sflag [#allocation5], 1
    %581 = vsyncpa %s580, 1

</llo_original>
